<compile_context>
chip_gen: v5e
topology: v5e:2x2
jax: 0.10.0
libtpu: 0.0.40
codegen_flags: <defaults>
</compile_context>

<pallas_src>
import functools

import jax
import jax.numpy as jnp
from jax.experimental import pallas as pl
from jax.experimental.pallas import tpu as pltpu


def _round_up(x, m):
    return (x + m - 1) // m * m


def citeulike_kernel(text_ref, user_ref,
                     w1u_ref, w1t_ref, b1_ref,
                     w2_ref, b2_ref,
                     w3_ref, b3_ref,
                     out_ref):
    # Streamed activations arrive in a compact dtype (bf16); compute in f32.
    text = text_ref[...].astype(jnp.float32)   # (TB, E)
    user = user_ref[...].astype(jnp.float32)   # (TB, U)

    # Layer 1: Dropout(id) -> Linear(E+U -> L1) -> ReLU, as a split matmul:
    #   cat([user, text], 1) @ W1 == user @ W1[:U] + text @ W1[U:]
    h1 = (jnp.dot(user, w1u_ref[...], preferred_element_type=jnp.float32)
          + jnp.dot(text, w1t_ref[...], preferred_element_type=jnp.float32)
          + b1_ref[...])                        # (TB, L1p)
    h1 = jnp.maximum(h1, 0.0)

    # Layer 2: Dropout(id) -> Linear(L1 -> L2) -> ReLU
    h2 = jnp.dot(h1, w2_ref[...], preferred_element_type=jnp.float32) + b2_ref[...]
    h2 = jnp.maximum(h2, 0.0)                   # (TB, L2p)

    # Output layer: Dropout(id) -> Linear(L2 -> 1) -> sigmoid.
    # Contract w3_row (1, L2p) against h2 (TB, L2p) on L2p -> (1, TB):
    # result is lane-dense (batch on lanes), no N=1 MXU pass, no relayout.
    logit = jax.lax.dot_general(
        w3_ref[...], h2,
        dimension_numbers=(((1,), (1,)), ((), ())),
        preferred_element_type=jnp.float32)     # (1, TB)
    out_ref[...] = jax.nn.sigmoid(logit + b3_ref[...])


@functools.partial(jax.jit, static_argnames=("tb",))
def citeulike_forward(text_mean, user_emb, params, *, tb=512):
    """text_mean: (B, E) f32, user_emb: (B, U) f32 -> (B, 1) f32 probabilities."""
    B, E = text_mean.shape
    U = user_emb.shape[1]

    # Batch tile: lane-dense output wants TB to be a multiple of 128.
    tb = min(tb, _round_up(B, 128))
    b_pad = _round_up(B, tb)
    grid = (b_pad // tb,)

    # Stream activations in bf16 (halves HBM bytes); zero-pad batch to b_pad.
    stream_dtype = jnp.bfloat16
    text_p = jnp.zeros((b_pad, E), stream_dtype).at[:B].set(
        text_mean.astype(stream_dtype))
    user_p = jnp.zeros((b_pad, U), stream_dtype).at[:B].set(
        user_emb.astype(stream_dtype))

    w1u, w1t = params["w1u"], params["w1t"]
    b1, w2, b2 = params["b1"], params["w2"], params["b2"]
    w3r, b3 = params["w3_row"], params["b3"]
    L1p, L2p = w1u.shape[1], w2.shape[1]

    def batch_spec(feat):
        return pl.BlockSpec((tb, feat), lambda i: (i, 0))

    def const_spec(arr):
        return pl.BlockSpec(arr.shape, lambda i: (0, 0))

    flops = 2 * b_pad * (U * L1p + E * L1p + L1p * L2p + L2p)
    bytes_accessed = (
        text_p.size * text_p.dtype.itemsize
        + user_p.size * user_p.dtype.itemsize
        + sum(a.size * a.dtype.itemsize for a in (w1u, w1t, b1, w2, b2, w3r, b3))
        + b_pad * 4)

    out = pl.pallas_call(
        citeulike_kernel,
        out_shape=jax.ShapeDtypeStruct((1, b_pad), jnp.float32),
        grid=grid,
        in_specs=[
            batch_spec(E),            # text mean   (streamed, batch-tiled)
            batch_spec(U),            # user emb    (streamed, batch-tiled)
            const_spec(w1u),          # weights/biases: VMEM-resident
            const_spec(w1t),
            const_spec(b1),
            const_spec(w2),
            const_spec(b2),
            const_spec(w3r),
            const_spec(b3),
        ],
        out_specs=pl.BlockSpec((1, tb), lambda i: (0, i)),   # lane-dense output
        compiler_params=pltpu.CompilerParams(
            dimension_semantics=("parallel",),               # megacore on v7x
            vmem_limit_bytes=32 * 1024 * 1024),
        cost_estimate=pl.CostEstimate(
            flops=flops, transcendentals=b_pad, bytes_accessed=bytes_accessed),
    )(text_p, user_p, w1u, w1t, b1, w2, b2, w3r, b3)

    return out[0, :B].reshape(B, 1)


def init_params(key, num_text, emb_dim, num_author, user_dim, l1, l2,
                *, l1_pad=128, l2_pad=128):
    """Synthetic, deterministic params; hidden dims zero-padded to 128."""
    ks = jax.random.split(key, 8)
    text_vectors = jax.random.normal(ks[0], (num_text, emb_dim), jnp.float32)
    user_table = jax.random.uniform(ks[1], (num_author, user_dim), jnp.float32,
                                    minval=0.0, maxval=200.0)

    def pad2(a, rows, cols):
        return jnp.zeros((rows, cols), a.dtype).at[:a.shape[0], :a.shape[1]].set(a)

    in1 = emb_dim + user_dim
    s1 = 1.0 / (in1 ** 0.5)
    w1 = jax.random.uniform(ks[2], (in1, l1), jnp.float32, -s1, s1)
    b1 = jax.random.uniform(ks[3], (1, l1), jnp.float32, -s1, s1)
    s2 = 1.0 / (l1 ** 0.5)
    w2 = jax.random.uniform(ks[4], (l1, l2), jnp.float32, -s2, s2)
    b2 = jax.random.uniform(ks[5], (1, l2), jnp.float32, -s2, s2)
    s3 = 1.0 / (l2 ** 0.5)
    w3 = jax.random.uniform(ks[6], (l2, 1), jnp.float32, -s3, s3)
    b3 = jax.random.uniform(ks[7], (1, 1), jnp.float32, -s3, s3)

    return {
        "text_vectors": text_vectors,
        "user_table": user_table,
        # First layer split for the [user, text] concat order; padded to l1_pad.
        "w1u": pad2(w1[:user_dim, :], user_dim, l1_pad),
        "w1t": pad2(w1[user_dim:, :], emb_dim, l1_pad),
        "b1": pad2(b1, 1, l1_pad),
        "w2": pad2(w2, l1_pad, l2_pad),
        "b2": pad2(b2, 1, l2_pad),
        "w3_row": pad2(w3.T, 1, l2_pad),   # stored as a (1, L2p) row
        "b3": b3,                          # (1, 1)
    }


def reference_forward(text_mean, user_emb, params):
    """Pure-JAX reference using the same bf16-rounded streamed inputs."""
    t = text_mean.astype(jnp.bfloat16).astype(jnp.float32)
    u = user_emb.astype(jnp.bfloat16).astype(jnp.float32)
    h1 = jnp.maximum(u @ params["w1u"] + t @ params["w1t"] + params["b1"], 0.0)
    h2 = jnp.maximum(h1 @ params["w2"] + params["b2"], 0.0)
    logit = h2 @ params["w3_row"].T + params["b3"]
    return jax.nn.sigmoid(logit)


if __name__ == "__main__":
    # Small, forward-consistent shapes.
    B = 8            # batch
    S = 8            # text sequence length (seq-first, torchtext style)
    EMB = 32         # embedding_dim of text_vectors
    USER_DIM = 10    # user_dim default
    L1, L2 = 50, 50
    NUM_TEXT = 100   # text vocab size
    NUM_AUTHOR = 20  # num_author

    key = jax.random.PRNGKey(0)
    pkey, tkey, ukey = jax.random.split(key, 3)
    params = init_params(pkey, NUM_TEXT, EMB, NUM_AUTHOR, USER_DIM, L1, L2)

    # x.text: (S, B) int ids, x.user: (B,) int ids
    text_ids = jax.random.randint(tkey, (S, B), 0, NUM_TEXT, dtype=jnp.int32)
    user_ids = jax.random.randint(ukey, (B,), 0, NUM_AUTHOR, dtype=jnp.int32)

    # Embedding gather + mean-over-seq done in plain-JAX glue; only the
    # pre-reduced (B, E) text mean is streamed into the kernel.
    text_mean = jnp.mean(params["text_vectors"][text_ids], axis=0)  # (B, EMB)
    user_emb = params["user_table"][user_ids]                       # (B, USER_DIM)

    out = citeulike_forward(text_mean, user_emb, params)
    jax.block_until_ready(out)

    assert out.shape == (B, 1) and out.dtype == jnp.float32
    ref = reference_forward(text_mean, user_emb, params)
    assert bool(jnp.all(jnp.isfinite(out)))
    assert bool(jnp.allclose(out, ref, atol=2e-3, rtol=2e-3))
    print("KERNEL_OK")
</pallas_src>

<mosaic_0001>
module attributes {stable_mosaic.version = 11 : i64} {
  func.func @citeulike_kernel(%arg0: i32, %arg1: memref<128x32xbf16, #tpu.memory_space<vmem>>, %arg2: memref<128x10xbf16, #tpu.memory_space<vmem>>, %arg3: memref<10x128xf32, #tpu.memory_space<vmem>>, %arg4: memref<32x128xf32, #tpu.memory_space<vmem>>, %arg5: memref<1x128xf32, #tpu.memory_space<vmem>>, %arg6: memref<128x128xf32, #tpu.memory_space<vmem>>, %arg7: memref<1x128xf32, #tpu.memory_space<vmem>>, %arg8: memref<1x128xf32, #tpu.memory_space<vmem>>, %arg9: memref<1x1xf32, #tpu.memory_space<vmem>>, %arg10: memref<1x128xf32, #tpu.memory_space<vmem>>) attributes {dimension_semantics = [#tpu.dimension_semantics<parallel>], iteration_bounds = array<i64: 1>, scalar_prefetch = 0 : i64, scratch_operands = 0 : i64, tpu.core_type = #tpu.core_type<tc>, window_params = [{transform_indices = @transform_0, window_bounds = array<i64: 128, 32>}, {transform_indices = @transform_1, window_bounds = array<i64: 128, 10>}, {pipeline_mode = #tpu.pipeline_mode<synchronous>, transform_indices = @transform_2, window_bounds = array<i64: 10, 128>}, {pipeline_mode = #tpu.pipeline_mode<synchronous>, transform_indices = @transform_3, window_bounds = array<i64: 32, 128>}, {pipeline_mode = #tpu.pipeline_mode<synchronous>, transform_indices = @transform_4, window_bounds = array<i64: 1, 128>}, {pipeline_mode = #tpu.pipeline_mode<synchronous>, transform_indices = @transform_5, window_bounds = array<i64: 128, 128>}, {pipeline_mode = #tpu.pipeline_mode<synchronous>, transform_indices = @transform_6, window_bounds = array<i64: 1, 128>}, {pipeline_mode = #tpu.pipeline_mode<synchronous>, transform_indices = @transform_7, window_bounds = array<i64: 1, 128>}, {pipeline_mode = #tpu.pipeline_mode<synchronous>, transform_indices = @transform_8, window_bounds = array<i64: 1, 1>}, {transform_indices = @transform_9, window_bounds = array<i64: 1, 128>}]} {
    %c0 = arith.constant 0 : index
    %c0_0 = arith.constant 0 : index
    %0 = vector.load %arg1[%c0, %c0_0] : memref<128x32xbf16, #tpu.memory_space<vmem>>, vector<128x32xbf16>
    %1 = arith.extf %0 : vector<128x32xbf16> to vector<128x32xf32>
    %c0_1 = arith.constant 0 : index
    %c0_2 = arith.constant 0 : index
    %2 = vector.load %arg2[%c0_1, %c0_2] : memref<128x10xbf16, #tpu.memory_space<vmem>>, vector<128x10xbf16>
    %3 = arith.extf %2 : vector<128x10xbf16> to vector<128x10xf32>
    %c0_3 = arith.constant 0 : index
    %c0_4 = arith.constant 0 : index
    %4 = vector.load %arg3[%c0_3, %c0_4] : memref<10x128xf32, #tpu.memory_space<vmem>>, vector<10x128xf32>
    %cst = arith.constant dense<0.000000e+00> : vector<128x128xf32>
    %5 = tpu.matmul %3, %4, %cst {dimension_numbers = #tpu.dot_dimension_numbers<[1], [0], [0], [1], [0, 0, 1, 1], [], []>} : vector<128x10xf32>, vector<10x128xf32>, vector<128x128xf32> -> vector<128x128xf32>
    %c0_5 = arith.constant 0 : index
    %c0_6 = arith.constant 0 : index
    %6 = vector.load %arg4[%c0_5, %c0_6] : memref<32x128xf32, #tpu.memory_space<vmem>>, vector<32x128xf32>
    %cst_7 = arith.constant dense<0.000000e+00> : vector<128x128xf32>
    %7 = tpu.matmul %1, %6, %cst_7 {dimension_numbers = #tpu.dot_dimension_numbers<[1], [0], [0], [1], [0, 0, 1, 1], [], []>} : vector<128x32xf32>, vector<32x128xf32>, vector<128x128xf32> -> vector<128x128xf32>
    %8 = arith.addf %5, %7 : vector<128x128xf32>
    %c0_8 = arith.constant 0 : index
    %c0_9 = arith.constant 0 : index
    %9 = vector.load %arg5[%c0_8, %c0_9] : memref<1x128xf32, #tpu.memory_space<vmem>>, vector<1x128xf32>
    %10 = vector.broadcast %9 : vector<1x128xf32> to vector<128x128xf32>
    %11 = arith.addf %8, %10 : vector<128x128xf32>
    %cst_10 = arith.constant 0.000000e+00 : f32
    %12 = vector.broadcast %cst_10 : f32 to vector<128x128xf32>
    %13 = arith.maximumf %11, %12 : vector<128x128xf32>
    %c0_11 = arith.constant 0 : index
    %c0_12 = arith.constant 0 : index
    %14 = vector.load %arg6[%c0_11, %c0_12] : memref<128x128xf32, #tpu.memory_space<vmem>>, vector<128x128xf32>
    %cst_13 = arith.constant dense<0.000000e+00> : vector<128x128xf32>
    %15 = tpu.matmul %13, %14, %cst_13 {dimension_numbers = #tpu.dot_dimension_numbers<[1], [0], [0], [1], [0, 0, 1, 1], [], []>} : vector<128x128xf32>, vector<128x128xf32>, vector<128x128xf32> -> vector<128x128xf32>
    %c0_14 = arith.constant 0 : index
    %c0_15 = arith.constant 0 : index
    %16 = vector.load %arg7[%c0_14, %c0_15] : memref<1x128xf32, #tpu.memory_space<vmem>>, vector<1x128xf32>
    %17 = vector.broadcast %16 : vector<1x128xf32> to vector<128x128xf32>
    %18 = arith.addf %15, %17 : vector<128x128xf32>
    %cst_16 = arith.constant 0.000000e+00 : f32
    %19 = vector.broadcast %cst_16 : f32 to vector<128x128xf32>
    %20 = arith.maximumf %18, %19 : vector<128x128xf32>
    %c0_17 = arith.constant 0 : index
    %c0_18 = arith.constant 0 : index
    %21 = vector.load %arg8[%c0_17, %c0_18] : memref<1x128xf32, #tpu.memory_space<vmem>>, vector<1x128xf32>
    %cst_19 = arith.constant dense<0.000000e+00> : vector<1x128xf32>
    %22 = tpu.matmul %21, %20, %cst_19 {dimension_numbers = #tpu.dot_dimension_numbers<[1], [1], [0], [0], [0, 0, 1, 0], [], []>} : vector<1x128xf32>, vector<128x128xf32>, vector<1x128xf32> -> vector<1x128xf32>
    %c0_20 = arith.constant 0 : index
    %c0_21 = arith.constant 0 : index
    %23 = vector.load %arg9[%c0_20, %c0_21] : memref<1x1xf32, #tpu.memory_space<vmem>>, vector<1x1xf32>
    %24 = vector.broadcast %23 : vector<1x1xf32> to vector<1x128xf32>
    %25 = arith.addf %22, %24 : vector<1x128xf32>
    %26 = arith.negf %25 : vector<1x128xf32>
    %27 = math.exp %26 : vector<1x128xf32>
    %cst_22 = arith.constant 1.000000e+00 : f32
    %28 = vector.broadcast %cst_22 : f32 to vector<1x128xf32>
    %29 = arith.addf %28, %27 : vector<1x128xf32>
    %30 = arith.divf %28, %29 : vector<1x128xf32>
    %c0_23 = arith.constant 0 : index
    %c0_24 = arith.constant 0 : index
    %31 = vector.load %arg10[%c0_23, %c0_24] : memref<1x128xf32, #tpu.memory_space<vmem>>, vector<1x128xf32>
    tpu.vector_store %arg10[%c0_23, %c0_24], %30 {strides = array<i32>} : memref<1x128xf32, #tpu.memory_space<vmem>>, vector<1x128xf32>,
    return
  }
  func.func @transform_0(%arg0: i32) -> (i32, i32) {
    %c0_i32 = arith.constant 0 : i32
    %c0_i32_0 = arith.constant 0 : i32
    return %arg0, %c0_i32 : i32, i32
  }
  func.func @transform_1(%arg0: i32) -> (i32, i32) {
    %c0_i32 = arith.constant 0 : i32
    %c0_i32_0 = arith.constant 0 : i32
    return %arg0, %c0_i32 : i32, i32
  }
  func.func @transform_2(%arg0: i32) -> (i32, i32) {
    %c0_i32 = arith.constant 0 : i32
    %c0_i32_0 = arith.constant 0 : i32
    %c0_i32_1 = arith.constant 0 : i32
    return %c0_i32, %c0_i32_0 : i32, i32
  }
  func.func @transform_3(%arg0: i32) -> (i32, i32) {
    %c0_i32 = arith.constant 0 : i32
    %c0_i32_0 = arith.constant 0 : i32
    %c0_i32_1 = arith.constant 0 : i32
    return %c0_i32, %c0_i32_0 : i32, i32
  }
  func.func @transform_4(%arg0: i32) -> (i32, i32) {
    %c0_i32 = arith.constant 0 : i32
    %c0_i32_0 = arith.constant 0 : i32
    %c0_i32_1 = arith.constant 0 : i32
    return %c0_i32, %c0_i32_0 : i32, i32
  }
  func.func @transform_5(%arg0: i32) -> (i32, i32) {
    %c0_i32 = arith.constant 0 : i32
    %c0_i32_0 = arith.constant 0 : i32
    %c0_i32_1 = arith.constant 0 : i32
    return %c0_i32, %c0_i32_0 : i32, i32
  }
  func.func @transform_6(%arg0: i32) -> (i32, i32) {
    %c0_i32 = arith.constant 0 : i32
    %c0_i32_0 = arith.constant 0 : i32
    %c0_i32_1 = arith.constant 0 : i32
    return %c0_i32, %c0_i32_0 : i32, i32
  }
  func.func @transform_7(%arg0: i32) -> (i32, i32) {
    %c0_i32 = arith.constant 0 : i32
    %c0_i32_0 = arith.constant 0 : i32
    %c0_i32_1 = arith.constant 0 : i32
    return %c0_i32, %c0_i32_0 : i32, i32
  }
  func.func @transform_8(%arg0: i32) -> (i32, i32) {
    %c0_i32 = arith.constant 0 : i32
    %c0_i32_0 = arith.constant 0 : i32
    %c0_i32_1 = arith.constant 0 : i32
    return %c0_i32, %c0_i32_0 : i32, i32
  }
  func.func @transform_9(%arg0: i32) -> (i32, i32) {
    %c0_i32 = arith.constant 0 : i32
    %c0_i32_0 = arith.constant 0 : i32
    return %c0_i32, %arg0 : i32, i32
  }
}

</mosaic_0001>

<llo_original>
// kernel: citeulike_forward.1
$region0: #{citeulike_forward.1}
  #allocation0 [shape = 'u32[]', space=smem, size = 0x4, offset = 0x4, fixed_abs, tag = 'smem constant byte address 0x4 - core index']
  #allocation1 [shape = 'u32[72,128]{1,0:T(1,128)}', space=vmem, size = 0x9000, scoped, tag = 'internal scratch']
  #allocation2 [shape = 'f32[1,1]{1,0:T(1,128)S(1)}', space=vmem, size = 0x200, scoped, tag = 'scoped memory for citeulike_forward.1']
  %s0 = inlined_call_operand.vmem [shape: bf16[128,32], index: 0, kind: input, shape index: {}]
  %s1 = inlined_call_operand.vmem [shape: bf16[128,10], index: 1, kind: input, shape index: {}]
  %s2 = inlined_call_operand.hbm [shape: f32[10,128], index: 2, kind: input, shape index: {}]
  %s3 = inlined_call_operand.vmem [shape: f32[32,128], index: 3, kind: input, shape index: {}]
  %s4 = inlined_call_operand.hbm [shape: f32[1,128], index: 4, kind: input, shape index: {}]
  %s5 = inlined_call_operand.vmem [shape: f32[128,128], index: 5, kind: input, shape index: {}]
  %s6 = inlined_call_operand.hbm [shape: f32[1,128], index: 6, kind: input, shape index: {}]
  %s7 = inlined_call_operand.hbm [shape: f32[1,128], index: 7, kind: input, shape index: {}]
  %s8 = inlined_call_operand.<no memory space> [shape: f32[1,1], index: 8, kind: input, shape index: {}]
  %s9 = inlined_call_operand.vmem [shape: f32[1,128], index: 9, kind: output, shape index: {}]
  %s10 = sld [smem:[#allocation0]]
  $region62: #{citeulike_forward.1} parent=0
    _
  %s12 = ssub.s32 1, %s10
  %s13 = scalar_select 0, %s12, %s10
  %v14 = vstv %s8
  %15 = vst [vmem:[#allocation2] sm:$0x1] %v14
  $region1: #{citeulike_forward.1} parent=0
    #allocation3 [shape = 'u8[8192]{0}', space=vmem, size = 0x2000, scoped, tag = 'input window, operand 2, single buffered']
    #allocation4 [shape = 's32[1]{0}', space=sflag, size = 0x4, scoped, tag = 'scoped memory for citeulike_forward.1']
    #allocation5 [shape = 'u8[512]{0}', space=vmem, size = 0x400, scoped, tag = 'input window, operand 4, single buffered']
    #allocation6 [shape = 's32[1]{0}', space=sflag, size = 0x4, scoped, tag = 'scoped memory for citeulike_forward.1']
    #allocation7 [shape = 'u8[512]{0}', space=vmem, size = 0x400, scoped, tag = 'input window, operand 6, single buffered']
    #allocation8 [shape = 'u8[512]{0}', space=vmem, size = 0x400, scoped, tag = 'input window, operand 7, single buffered']
    #allocation9 [shape = 's32[1]{0}', space=sflag, size = 0x4, scoped, tag = 'scoped memory for citeulike_forward.1']
    %16 = vsyncpa [#allocation4], 0
    %17 = vsyncpa [#allocation6], 0
    %18 = vsyncpa [#allocation9], 0
    // Predicated region
    $region2: #{citeulike_forward.1} parent=1 // pred_check
      _
    $region3: #{citeulike_forward.1} parent=1 // pred_check_branch
      %20 = sbr.rel (0) target = $region5
    $region4: #{citeulike_forward.1} parent=1 // pred_region
      _
    $region5: #{citeulike_forward.1} parent=1 // pred_fallthru
      _
    // Predicated region
    $region6: #{citeulike_forward.1} parent=1 // pred_check
      _
    $region7: #{citeulike_forward.1} parent=1 // pred_check_branch
      %22 = sbr.rel (0) target = $region9
    $region8: #{citeulike_forward.1} parent=1 // pred_region
      _
    $region9: #{citeulike_forward.1} parent=1 // pred_fallthru
      _
    // Predicated region
    $region10: #{citeulike_forward.1} parent=1 // pred_check
      _
    $region11: #{citeulike_forward.1} parent=1 // pred_check_branch
      %24 = sbr.rel (0) target = $region13
    $region12: #{citeulike_forward.1} parent=1 // pred_region
      %26 = vsyncadd [#allocation4], 0
      %s27 = sshll.u32 %s2, 4
      %s28 = int_to_ptr.hbm [resolvable:$true] %s27
      %s29 = sshll.u32 [#allocation3], 4
      %s30 = int_to_ptr.vmem [resolvable:$true] %s29
      %35 = dma.hbm_to_vmem [thread:$0]  %s28, 256, %s30, [#allocation4], 128, 128, 8
    $region13: #{citeulike_forward.1} parent=1 // pred_fallthru
      _
    // Predicated region
    $region14: #{citeulike_forward.1} parent=1 // pred_check
      _
    $region15: #{citeulike_forward.1} parent=1 // pred_check_branch
      %37 = sbr.rel (0) target = $region17
    $region16: #{citeulike_forward.1} parent=1 // pred_region
      _
    $region17: #{citeulike_forward.1} parent=1 // pred_fallthru
      _
    // Predicated region
    $region18: #{citeulike_forward.1} parent=1 // pred_check
      _
    $region19: #{citeulike_forward.1} parent=1 // pred_check_branch
      %39 = sbr.rel (0) target = $region21
    $region20: #{citeulike_forward.1} parent=1 // pred_region
      %41 = vsyncadd [#allocation6], 0
      %s43 = sshll.u32 %s4, 4
      %s44 = int_to_ptr.hbm [resolvable:$true] %s43
      %s45 = sshll.u32 [#allocation5], 4
      %s46 = int_to_ptr.vmem [resolvable:$true] %s45
      %48 = dma.hbm_to_vmem [thread:$0]  %s44, 16, %s46, [#allocation6]
    $region21: #{citeulike_forward.1} parent=1 // pred_fallthru
      _
    // Predicated region
    $region22: #{citeulike_forward.1} parent=1 // pred_check
      _
    $region23: #{citeulike_forward.1} parent=1 // pred_check_branch
      %50 = sbr.rel (0) target = $region25
    $region24: #{citeulike_forward.1} parent=1 // pred_region
      _
    $region25: #{citeulike_forward.1} parent=1 // pred_fallthru
      _
    // Predicated region
    $region26: #{citeulike_forward.1} parent=1 // pred_check
      _
    $region27: #{citeulike_forward.1} parent=1 // pred_check_branch
      %52 = sbr.rel (0) target = $region29
    $region28: #{citeulike_forward.1} parent=1 // pred_region
      %54 = vsyncadd [#allocation6], 0
      %s56 = sshll.u32 %s6, 4
      %s57 = int_to_ptr.hbm [resolvable:$true] %s56
      %s58 = sshll.u32 [#allocation7], 4
      %s59 = int_to_ptr.vmem [resolvable:$true] %s58
      %61 = dma.hbm_to_vmem [thread:$0]  %s57, 16, %s59, [#allocation6]
    $region29: #{citeulike_forward.1} parent=1 // pred_fallthru
      _
    // Predicated region
    $region30: #{citeulike_forward.1} parent=1 // pred_check
      _
    $region31: #{citeulike_forward.1} parent=1 // pred_check_branch
      %63 = sbr.rel (0) target = $region33
    $region32: #{citeulike_forward.1} parent=1 // pred_region
      %65 = vsyncadd [#allocation9], 0
      %s67 = sshll.u32 %s7, 4
      %s68 = int_to_ptr.hbm [resolvable:$true] %s67
      %s69 = sshll.u32 [#allocation8], 4
      %s70 = int_to_ptr.vmem [resolvable:$true] %s69
      %72 = dma.hbm_to_vmem [thread:$0]  %s68, 16, %s70, [#allocation9]
    $region33: #{citeulike_forward.1} parent=1 // pred_fallthru
      _
    // Predicated region
    $region34: #{citeulike_forward.1} parent=1 // pred_check
      _
    $region35: #{citeulike_forward.1} parent=1 // pred_check_branch
      %74 = sbr.rel (0) target = $region37
    $region36: #{citeulike_forward.1} parent=1 // pred_region
      _
    $region37: #{citeulike_forward.1} parent=1 // pred_fallthru
      _
    // Predicated region
    $region38: #{citeulike_forward.1} parent=1 // pred_check
      _
    $region39: #{citeulike_forward.1} parent=1 // pred_check_branch
      %76 = sbr.rel (0) target = $region41
    $region40: #{citeulike_forward.1} parent=1 // pred_region
      %78 = dma.done [#allocation4], 256
    $region41: #{citeulike_forward.1} parent=1 // pred_fallthru
      _
    // Predicated region
    $region42: #{citeulike_forward.1} parent=1 // pred_check
      _
    $region43: #{citeulike_forward.1} parent=1 // pred_check_branch
      %80 = sbr.rel (0) target = $region45
    $region44: #{citeulike_forward.1} parent=1 // pred_region
      %82 = dma.done [#allocation6], 16
    $region45: #{citeulike_forward.1} parent=1 // pred_fallthru
      _
    // Predicated region
    $region46: #{citeulike_forward.1} parent=1 // pred_check
      _
    $region47: #{citeulike_forward.1} parent=1 // pred_check_branch
      %84 = sbr.rel (0) target = $region49
    $region48: #{citeulike_forward.1} parent=1 // pred_region
      %86 = dma.done [#allocation6], 16
    $region49: #{citeulike_forward.1} parent=1 // pred_fallthru
      _
    // Predicated region
    $region50: #{citeulike_forward.1} parent=1 // pred_check
      _
    $region51: #{citeulike_forward.1} parent=1 // pred_check_branch
      %88 = sbr.rel (0) target = $region53
    $region52: #{citeulike_forward.1} parent=1 // pred_region
      %90 = dma.done [#allocation9], 16
    $region53: #{citeulike_forward.1} parent=1 // pred_fallthru
      _
    %v91 = vld [vmem:[%s0] sm:$0xf]
    %v92 = vld [vmem:[%s0 + $0x4] sm:$0xf]
    %v93 = vld [vmem:[%s0 + $0x8] sm:$0xf]
    %v94 = vld [vmem:[%s0 + $0xc] sm:$0xf]
    %v95 = vld [vmem:[%s0 + $0x10] sm:$0xf]
    %v96 = vld [vmem:[%s0 + $0x14] sm:$0xf]
    %v97 = vld [vmem:[%s0 + $0x18] sm:$0xf]
    %v98 = vld [vmem:[%s0 + $0x1c] sm:$0xf]
    %v99 = vld [vmem:[%s0 + $0x20] sm:$0xf]
    %v100 = vld [vmem:[%s0 + $0x24] sm:$0xf]
    %v101 = vld [vmem:[%s0 + $0x28] sm:$0xf]
    %v102 = vld [vmem:[%s0 + $0x2c] sm:$0xf]
    %v103 = vld [vmem:[%s0 + $0x30] sm:$0xf]
    %v104 = vld [vmem:[%s0 + $0x34] sm:$0xf]
    %v105 = vld [vmem:[%s0 + $0x38] sm:$0xf]
    %v106 = vld [vmem:[%s0 + $0x3c] sm:$0xf]
    %v107 = vunpack.c.l.bf16 %v91
    %v108 = vunpack.c.l.bf16 %v92
    %v109 = vunpack.c.l.bf16 %v93
    %v110 = vunpack.c.l.bf16 %v94
    %v111 = vunpack.c.l.bf16 %v95
    %v112 = vunpack.c.l.bf16 %v96
    %v113 = vunpack.c.l.bf16 %v97
    %v114 = vunpack.c.l.bf16 %v98
    %v115 = vunpack.c.l.bf16 %v99
    %v116 = vunpack.c.l.bf16 %v100
    %v117 = vunpack.c.l.bf16 %v101
    %v118 = vunpack.c.l.bf16 %v102
    %v119 = vunpack.c.l.bf16 %v103
    %v120 = vunpack.c.l.bf16 %v104
    %v121 = vunpack.c.l.bf16 %v105
    %v122 = vunpack.c.l.bf16 %v106
    %v123 = vld [vmem:[%s1] sm:$0xf]
    %v124 = vld [vmem:[%s1 + $0x4] sm:$0xf]
    %v125 = vld [vmem:[%s1 + $0x8] sm:$0xf]
    %v126 = vld [vmem:[%s1 + $0xc] sm:$0xf]
    %v127 = vld [vmem:[%s1 + $0x10] sm:$0xf]
    %v128 = vld [vmem:[%s1 + $0x14] sm:$0xf]
    %v129 = vld [vmem:[%s1 + $0x18] sm:$0xf]
    %v130 = vld [vmem:[%s1 + $0x1c] sm:$0xf]
    %v131 = vld [vmem:[%s1 + $0x20] sm:$0xf]
    %v132 = vld [vmem:[%s1 + $0x24] sm:$0xf]
    %v133 = vld [vmem:[%s1 + $0x28] sm:$0xf]
    %v134 = vld [vmem:[%s1 + $0x2c] sm:$0xf]
    %v135 = vld [vmem:[%s1 + $0x30] sm:$0xf]
    %v136 = vld [vmem:[%s1 + $0x34] sm:$0xf]
    %v137 = vld [vmem:[%s1 + $0x38] sm:$0xf]
    %v138 = vld [vmem:[%s1 + $0x3c] sm:$0xf]
    %v139 = vunpack.c.l.bf16 %v123
    %v140 = vunpack.c.l.bf16 %v124
    %v141 = vunpack.c.l.bf16 %v125
    %v142 = vunpack.c.l.bf16 %v126
    %v143 = vunpack.c.l.bf16 %v127
    %v144 = vunpack.c.l.bf16 %v128
    %v145 = vunpack.c.l.bf16 %v129
    %v146 = vunpack.c.l.bf16 %v130
    %v147 = vunpack.c.l.bf16 %v131
    %v148 = vunpack.c.l.bf16 %v132
    %v149 = vunpack.c.l.bf16 %v133
    %v150 = vunpack.c.l.bf16 %v134
    %v151 = vunpack.c.l.bf16 %v135
    %v152 = vunpack.c.l.bf16 %v136
    %v153 = vunpack.c.l.bf16 %v137
    %v154 = vunpack.c.l.bf16 %v138
    %v155 = vld [vmem:[#allocation3] sm:$0xff]
    %v156 = vld [vmem:[#allocation3 + $0x8] sm:$0x3]
    %v157 = vld [vmem:[%s3] sm:$0xff]
    %v158 = vld [vmem:[%s3 + $0x8] sm:$0xff]
    %v159 = vld [vmem:[%s3 + $0x10] sm:$0xff]
    %v160 = vld [vmem:[%s3 + $0x18] sm:$0xff]
    %vm161 = vcmask 261120
    %v163 = vsel %vm161, %v107, 0
    %v166 = vsel %vm161, %v108, 0
    %v169 = vsel %vm161, %v109, 0
    %v172 = vsel %vm161, %v110, 0
    %v175 = vsel %vm161, %v111, 0
    %v178 = vsel %vm161, %v112, 0
    %v181 = vsel %vm161, %v113, 0
    %v184 = vsel %vm161, %v114, 0
    %v187 = vsel %vm161, %v115, 0
    %v190 = vsel %vm161, %v116, 0
    %v193 = vsel %vm161, %v117, 0
    %v196 = vsel %vm161, %v118, 0
    %v199 = vsel %vm161, %v119, 0
    %v202 = vsel %vm161, %v120, 0
    %v205 = vsel %vm161, %v121, 0
    %v208 = vsel %vm161, %v122, 0
    %210 = vmatpush.msra.mxu0 0.0
    %211 = vmatpush.msra.mxu0 0.0
    %212 = vmatpush.msra.mxu0 0.0
    %213 = vmatpush.msra.mxu0 0.0
    %214 = vmatpush.msra.mxu0 0.0
    %215 = vmatpush.msra.mxu0 0.0
    %216 = vmatpush.msra.mxu0 0.0
    %217 = vmatpush.msra.mxu0 0.0
    %218 = vmatpush.msra.mxu0 0.0
    %219 = vmatpush.msra.mxu0 0.0
    %220 = vmatpush.msra.mxu0 0.0
    %221 = vmatpush.msra.mxu0 0.0
    %222 = vmatpush.msra.mxu0 %v160
    %223 = vmatpush.msra.mxu0 %v159
    %224 = vmatpush.msra.mxu0 %v158
    %225 = vmatpush.msra.mxu0 %v157
    %226 = vmatmul.f32.gmra.mxu0 %v163
    %v227 = vpop.f32.mrf.mxu0
    %v228 = vadd.f32 0.0, %v227
    %229 = vmatmul.f32.gmra.mxu0 %v166
    %v230 = vpop.f32.mrf.mxu0
    %v231 = vadd.f32 0.0, %v230
    %232 = vmatmul.f32.gmra.mxu0 %v169
    %v233 = vpop.f32.mrf.mxu0
    %v234 = vadd.f32 0.0, %v233
    %235 = vmatmul.f32.gmra.mxu0 %v172
    %v236 = vpop.f32.mrf.mxu0
    %v237 = vadd.f32 0.0, %v236
    %238 = vmatmul.f32.gmra.mxu0 %v175
    %v239 = vpop.f32.mrf.mxu0
    %v240 = vadd.f32 0.0, %v239
    %241 = vmatmul.f32.gmra.mxu0 %v178
    %v242 = vpop.f32.mrf.mxu0
    %v243 = vadd.f32 0.0, %v242
    %244 = vmatmul.f32.gmra.mxu0 %v181
    %v245 = vpop.f32.mrf.mxu0
    %v246 = vadd.f32 0.0, %v245
    %247 = vmatmul.f32.gmra.mxu0 %v184
    %v248 = vpop.f32.mrf.mxu0
    %v249 = vadd.f32 0.0, %v248
    %250 = vmatmul.f32.gmra.mxu0 %v187
    %v251 = vpop.f32.mrf.mxu0
    %v252 = vadd.f32 0.0, %v251
    %253 = vmatmul.f32.gmra.mxu0 %v190
    %v254 = vpop.f32.mrf.mxu0
    %v255 = vadd.f32 0.0, %v254
    %256 = vmatmul.f32.gmra.mxu0 %v193
    %v257 = vpop.f32.mrf.mxu0
    %v258 = vadd.f32 0.0, %v257
    %259 = vmatmul.f32.gmra.mxu0 %v196
    %v260 = vpop.f32.mrf.mxu0
    %v261 = vadd.f32 0.0, %v260
    %262 = vmatmul.f32.gmra.mxu0 %v199
    %v263 = vpop.f32.mrf.mxu0
    %v264 = vadd.f32 0.0, %v263
    %265 = vmatmul.f32.gmra.mxu0 %v202
    %v266 = vpop.f32.mrf.mxu0
    %v267 = vadd.f32 0.0, %v266
    %268 = vmatmul.f32.gmra.mxu0 %v205
    %v269 = vpop.f32.mrf.mxu0
    %v270 = vadd.f32 0.0, %v269
    %271 = vmatmul.f32.gmra.mxu0 %v208
    %v272 = vpop.f32.mrf.mxu0
    %v273 = vadd.f32 0.0, %v272
    %274 = vdwg.mxu0
    %vm275 = vcmask 80896
    %v277 = vsel %vm275, %v139, 0
    %v280 = vsel %vm275, %v140, 0
    %v283 = vsel %vm275, %v141, 0
    %v286 = vsel %vm275, %v142, 0
    %v289 = vsel %vm275, %v143, 0
    %v292 = vsel %vm275, %v144, 0
    %v295 = vsel %vm275, %v145, 0
    %v298 = vsel %vm275, %v146, 0
    %v301 = vsel %vm275, %v147, 0
    %v304 = vsel %vm275, %v148, 0
    %v307 = vsel %vm275, %v149, 0
    %v310 = vsel %vm275, %v150, 0
    %v313 = vsel %vm275, %v151, 0
    %v316 = vsel %vm275, %v152, 0
    %v319 = vsel %vm275, %v153, 0
    %v322 = vsel %vm275, %v154, 0
    %vm324 = vcmask 1041408
    %v326 = vsel %vm324, %v156, 0
    %328 = vmatpush.msra.mxu0 0.0
    %329 = vmatpush.msra.mxu0 0.0
    %330 = vmatpush.msra.mxu0 0.0
    %331 = vmatpush.msra.mxu0 0.0
    %332 = vmatpush.msra.mxu0 0.0
    %333 = vmatpush.msra.mxu0 0.0
    %334 = vmatpush.msra.mxu0 0.0
    %335 = vmatpush.msra.mxu0 0.0
    %336 = vmatpush.msra.mxu0 0.0
    %337 = vmatpush.msra.mxu0 0.0
    %338 = vmatpush.msra.mxu0 0.0
    %339 = vmatpush.msra.mxu0 0.0
    %340 = vmatpush.msra.mxu0 0.0
    %341 = vmatpush.msra.mxu0 0.0
    %342 = vmatpush.msra.mxu0 %v326
    %343 = vmatpush.msra.mxu0 %v155
    %344 = vmatmul.f32.gmra.mxu0 %v277
    %v345 = vpop.f32.mrf.mxu0
    %v346 = vadd.f32 %v228, %v345
    %347 = vmatmul.f32.gmra.mxu0 %v280
    %v348 = vpop.f32.mrf.mxu0
    %v349 = vadd.f32 %v231, %v348
    %350 = vmatmul.f32.gmra.mxu0 %v283
    %v351 = vpop.f32.mrf.mxu0
    %v352 = vadd.f32 %v234, %v351
    %353 = vmatmul.f32.gmra.mxu0 %v286
    %v354 = vpop.f32.mrf.mxu0
    %v355 = vadd.f32 %v237, %v354
    %356 = vmatmul.f32.gmra.mxu0 %v289
    %v357 = vpop.f32.mrf.mxu0
    %v358 = vadd.f32 %v240, %v357
    %359 = vmatmul.f32.gmra.mxu0 %v292
    %v360 = vpop.f32.mrf.mxu0
    %v361 = vadd.f32 %v243, %v360
    %362 = vmatmul.f32.gmra.mxu0 %v295
    %v363 = vpop.f32.mrf.mxu0
    %v364 = vadd.f32 %v246, %v363
    %365 = vmatmul.f32.gmra.mxu0 %v298
    %v366 = vpop.f32.mrf.mxu0
    %v367 = vadd.f32 %v249, %v366
    %368 = vmatmul.f32.gmra.mxu0 %v301
    %v369 = vpop.f32.mrf.mxu0
    %v370 = vadd.f32 %v252, %v369
    %371 = vmatmul.f32.gmra.mxu0 %v304
    %v372 = vpop.f32.mrf.mxu0
    %v373 = vadd.f32 %v255, %v372
    %374 = vmatmul.f32.gmra.mxu0 %v307
    %v375 = vpop.f32.mrf.mxu0
    %v376 = vadd.f32 %v258, %v375
    %377 = vmatmul.f32.gmra.mxu0 %v310
    %v378 = vpop.f32.mrf.mxu0
    %v379 = vadd.f32 %v261, %v378
    %380 = vmatmul.f32.gmra.mxu0 %v313
    %v381 = vpop.f32.mrf.mxu0
    %v382 = vadd.f32 %v264, %v381
    %383 = vmatmul.f32.gmra.mxu0 %v316
    %v384 = vpop.f32.mrf.mxu0
    %v385 = vadd.f32 %v267, %v384
    %386 = vmatmul.f32.gmra.mxu0 %v319
    %v387 = vpop.f32.mrf.mxu0
    %v388 = vadd.f32 %v270, %v387
    %389 = vmatmul.f32.gmra.mxu0 %v322
    %v390 = vpop.f32.mrf.mxu0
    %v391 = vadd.f32 %v273, %v390
    %392 = vdwg.mxu0
    %v393 = vld [vmem:[#allocation5] sm:$0x1]
    %v395 = vperm.slane %v393, 0
    %v397 = vadd.f32 %v346, %v395
    %v398 = vadd.f32 %v349, %v395
    %v399 = vadd.f32 %v352, %v395
    %v400 = vadd.f32 %v355, %v395
    %v401 = vadd.f32 %v358, %v395
    %v402 = vadd.f32 %v361, %v395
    %v403 = vadd.f32 %v364, %v395
    %v404 = vadd.f32 %v367, %v395
    %v405 = vadd.f32 %v370, %v395
    %v406 = vadd.f32 %v373, %v395
    %v407 = vadd.f32 %v376, %v395
    %v408 = vadd.f32 %v379, %v395
    %v409 = vadd.f32 %v382, %v395
    %v410 = vadd.f32 %v385, %v395
    %v411 = vadd.f32 %v388, %v395
    %v412 = vadd.f32 %v391, %v395
    %v413 = vmax.f32 %v397, 0.0
    %v414 = vmax.f32 %v398, 0.0
    %v415 = vmax.f32 %v399, 0.0
    %v416 = vmax.f32 %v400, 0.0
    %v417 = vmax.f32 %v401, 0.0
    %v418 = vmax.f32 %v402, 0.0
    %v419 = vmax.f32 %v403, 0.0
    %v420 = vmax.f32 %v404, 0.0
    %v421 = vmax.f32 %v405, 0.0
    %v422 = vmax.f32 %v406, 0.0
    %v423 = vmax.f32 %v407, 0.0
    %v424 = vmax.f32 %v408, 0.0
    %v425 = vmax.f32 %v409, 0.0
    %v426 = vmax.f32 %v410, 0.0
    %v427 = vmax.f32 %v411, 0.0
    %v428 = vmax.f32 %v412, 0.0
    %v429 = vld [vmem:[%s5] sm:$0xff]
    %v430 = vld [vmem:[%s5 + $0x8] sm:$0xff]
    %v431 = vld [vmem:[%s5 + $0x10] sm:$0xff]
    %v432 = vld [vmem:[%s5 + $0x18] sm:$0xff]
    %v433 = vld [vmem:[%s5 + $0x20] sm:$0xff]
    %v434 = vld [vmem:[%s5 + $0x28] sm:$0xff]
    %v435 = vld [vmem:[%s5 + $0x30] sm:$0xff]
    %v436 = vld [vmem:[%s5 + $0x38] sm:$0xff]
    %v437 = vld [vmem:[%s5 + $0x40] sm:$0xff]
    %v438 = vld [vmem:[%s5 + $0x48] sm:$0xff]
    %v439 = vld [vmem:[%s5 + $0x50] sm:$0xff]
    %v440 = vld [vmem:[%s5 + $0x58] sm:$0xff]
    %v441 = vld [vmem:[%s5 + $0x60] sm:$0xff]
    %v442 = vld [vmem:[%s5 + $0x68] sm:$0xff]
    %v443 = vld [vmem:[%s5 + $0x70] sm:$0xff]
    %v444 = vld [vmem:[%s5 + $0x78] sm:$0xff]
    %v445 = vld [vmem:[#allocation7] sm:$0x1]
    %v447 = vperm.slane %v445, 0
    %449 = vmatpush.msra.mxu0 %v444
    %450 = vmatpush.msra.mxu0 %v443
    %451 = vmatpush.msra.mxu0 %v442
    %452 = vmatpush.msra.mxu0 %v441
    %453 = vmatpush.msra.mxu0 %v440
    %454 = vmatpush.msra.mxu0 %v439
    %455 = vmatpush.msra.mxu0 %v438
    %456 = vmatpush.msra.mxu0 %v437
    %457 = vmatpush.msra.mxu0 %v436
    %458 = vmatpush.msra.mxu0 %v435
    %459 = vmatpush.msra.mxu0 %v434
    %460 = vmatpush.msra.mxu0 %v433
    %461 = vmatpush.msra.mxu0 %v432
    %462 = vmatpush.msra.mxu0 %v431
    %463 = vmatpush.msra.mxu0 %v430
    %464 = vmatpush.msra.mxu0 %v429
    %465 = vmatmul.f32.gmra.mxu0 %v413
    %v466 = vpop.f32.mrf.mxu0
    %v467 = vadd.f32 %v447, %v466
    %468 = vmatmul.f32.gmra.mxu0 %v414
    %v469 = vpop.f32.mrf.mxu0
    %v470 = vadd.f32 %v447, %v469
    %471 = vmatmul.f32.gmra.mxu0 %v415
    %v472 = vpop.f32.mrf.mxu0
    %v473 = vadd.f32 %v447, %v472
    %474 = vmatmul.f32.gmra.mxu0 %v416
    %v475 = vpop.f32.mrf.mxu0
    %v476 = vadd.f32 %v447, %v475
    %477 = vmatmul.f32.gmra.mxu0 %v417
    %v478 = vpop.f32.mrf.mxu0
    %v479 = vadd.f32 %v447, %v478
    %480 = vmatmul.f32.gmra.mxu0 %v418
    %v481 = vpop.f32.mrf.mxu0
    %v482 = vadd.f32 %v447, %v481
    %483 = vmatmul.f32.gmra.mxu0 %v419
    %v484 = vpop.f32.mrf.mxu0
    %v485 = vadd.f32 %v447, %v484
    %486 = vmatmul.f32.gmra.mxu0 %v420
    %v487 = vpop.f32.mrf.mxu0
    %v488 = vadd.f32 %v447, %v487
    %489 = vmatmul.f32.gmra.mxu0 %v421
    %v490 = vpop.f32.mrf.mxu0
    %v491 = vadd.f32 %v447, %v490
    %492 = vmatmul.f32.gmra.mxu0 %v422
    %v493 = vpop.f32.mrf.mxu0
    %v494 = vadd.f32 %v447, %v493
    %495 = vmatmul.f32.gmra.mxu0 %v423
    %v496 = vpop.f32.mrf.mxu0
    %v497 = vadd.f32 %v447, %v496
    %498 = vmatmul.f32.gmra.mxu0 %v424
    %v499 = vpop.f32.mrf.mxu0
    %v500 = vadd.f32 %v447, %v499
    %501 = vmatmul.f32.gmra.mxu0 %v425
    %v502 = vpop.f32.mrf.mxu0
    %v503 = vadd.f32 %v447, %v502
    %504 = vmatmul.f32.gmra.mxu0 %v426
    %v505 = vpop.f32.mrf.mxu0
    %v506 = vadd.f32 %v447, %v505
    %507 = vmatmul.f32.gmra.mxu0 %v427
    %v508 = vpop.f32.mrf.mxu0
    %v509 = vadd.f32 %v447, %v508
    %510 = vmatmul.f32.gmra.mxu0 %v428
    %v511 = vpop.f32.mrf.mxu0
    %v512 = vadd.f32 %v447, %v511
    %513 = vdwg.mxu0
    %v514 = vmax.f32 %v467, 0.0
    %v515 = vmax.f32 %v470, 0.0
    %v516 = vmax.f32 %v473, 0.0
    %v517 = vmax.f32 %v476, 0.0
    %v518 = vmax.f32 %v479, 0.0
    %v519 = vmax.f32 %v482, 0.0
    %v520 = vmax.f32 %v485, 0.0
    %v521 = vmax.f32 %v488, 0.0
    %v522 = vmax.f32 %v491, 0.0
    %v523 = vmax.f32 %v494, 0.0
    %v524 = vmax.f32 %v497, 0.0
    %v525 = vmax.f32 %v500, 0.0
    %v526 = vmax.f32 %v503, 0.0
    %v527 = vmax.f32 %v506, 0.0
    %v528 = vmax.f32 %v509, 0.0
    %v529 = vmax.f32 %v512, 0.0
    %v530 = vld [vmem:[#allocation8] sm:$0x1]
    %v531 = vld [vmem:[#allocation2] sm:$0x1]
    %533 = vset.pattern.permute.xlu0 0
    %534 = vperm.xlu0 %533, %v531
    %v535 = vpop.permute.xlu0 %534
    %v537 = vperm.slane %v535, 0
    %538 = vmatpush.xpose.msra.mxu0 %v529
    %539 = vmatpush.xpose.msra.mxu0 %v528
    %540 = vmatpush.xpose.msra.mxu0 %v527
    %541 = vmatpush.xpose.msra.mxu0 %v526
    %542 = vmatpush.xpose.msra.mxu0 %v525
    %543 = vmatpush.xpose.msra.mxu0 %v524
    %544 = vmatpush.xpose.msra.mxu0 %v523
    %545 = vmatpush.xpose.msra.mxu0 %v522
    %546 = vmatpush.xpose.msra.mxu0 %v521
    %547 = vmatpush.xpose.msra.mxu0 %v520
    %548 = vmatpush.xpose.msra.mxu0 %v519
    %549 = vmatpush.xpose.msra.mxu0 %v518
    %550 = vmatpush.xpose.msra.mxu0 %v517
    %551 = vmatpush.xpose.msra.mxu0 %v516
    %552 = vmatpush.xpose.msra.mxu0 %v515
    %553 = vmatpush.xpose.msra.mxu0 %v514
    %554 = vmatmul.f32.gmra.mxu0 %v530
    %v555 = vpop.f32.mrf.mxu0
    %v556 = vadd.f32 %v537, %v555
    %557 = vdwg.mxu0
    %v558 = vxor.u32 %v556, 2147483648
    %v559 = vmul.f32 %v558, 1.442695
    %v560 = vpow.pop %v559
    %v561 = vadd.f32 %v560, 1.0
    %v562 = vrcp.pop %v561
    %v563 = vmul.f32 %v561, %v562
    %v564 = vsub.f32 1.0, %v563
    %v565 = vmul.f32 %v562, %v564
    %v566 = vadd.f32 %v562, %v565
    %vm567 = vweird.f32 %v561
    %vm568 = vweird.f32 %v562
    %vm569 = vmor %vm567, %vm568
    %v570 = vsel %vm569, %v562, %v566
    %v571 = vand.u32 2147483647, %v561
    %vm572 = vcmp.eq.f32.partialorder %v571, 8.507059e+37
    %v573 = vand.u32 %v561, 2147483648
    %v574 = vor.u32 1.1754944e-38, %v573
    %v575 = vsel %vm572, %v574, %v570
    %v576 = vmul.f32 1.0, %v575
    %577 = vst [vmem:[%s9] sm:$0x1] %v576
    // Predicated region
    $region54: #{citeulike_forward.1} parent=1 // pred_check
      _
    $region55: #{citeulike_forward.1} parent=1 // pred_check_branch
      %579 = sbr.rel (0) target = $region57
    $region56: #{citeulike_forward.1} parent=1 // pred_region
      _
    $region57: #{citeulike_forward.1} parent=1 // pred_fallthru
      _
    // Predicated region
    $region58: #{citeulike_forward.1} parent=1 // pred_check
      _
    $region59: #{citeulike_forward.1} parent=1 // pred_check_branch
      %581 = sbr.rel (0) target = $region61
    $region60: #{citeulike_forward.1} parent=1 // pred_region
      _
    $region61: #{citeulike_forward.1} parent=1 // pred_fallthru
      _
    %582 = vsyncpa [#allocation4], 1
    %583 = vsyncpa [#allocation6], 1
    %584 = vsyncpa [#allocation9], 1

</llo_original>
